<compile_context>
chip_gen: v5e
topology: v5e:2x2
jax: 0.10.0
libtpu: 0.0.40
codegen_flags: <defaults>
</compile_context>

<pallas_src>
import jax
import jax.numpy as jnp
from jax.experimental import pallas as pl
from jax.experimental.pallas import tpu as pltpu


def _cdiv(a, b):
    return -(-a // b)


def _round_up(n, m):
    return _cdiv(n, m) * m


def qnet_kernel(x_ref, w1_ref, b1_ref, w2_ref, b2_ref, out_ref):
    # fc1: (tile_b, obs) -> (tile_b, hidden); bf16 MXU inputs, f32 accumulate.
    x = x_ref[...].astype(w1_ref.dtype)
    h = jnp.dot(x, w1_ref[...], preferred_element_type=jnp.float32)
    # bias + ReLU in f32 (v5e-safe: no bf16 VPU there).
    h = jnp.maximum(h + b1_ref[...], 0.0)
    # fc2: (tile_b, hidden) @ (hidden, n_actions); bf16 MXU inputs, f32 acc.
    o = jnp.dot(h.astype(w2_ref.dtype), w2_ref[...],
                preferred_element_type=jnp.float32)
    out_ref[...] = (o + b2_ref[...]).astype(out_ref.dtype)


def init_qnet_params(key, obs_size, n_actions, hidden_size=128):
    """Logical f32 params; init matches PyTorch nn.Linear default:
    U(-1/sqrt(fan_in), 1/sqrt(fan_in)) for weight and bias.
    Weights stored (in_features, out_features), i.e. transposed vs PyTorch."""
    k1, k2, k3, k4 = jax.random.split(key, 4)
    bound1 = 1.0 / jnp.sqrt(obs_size)
    bound2 = 1.0 / jnp.sqrt(hidden_size)
    w1 = jax.random.uniform(k1, (obs_size, hidden_size), jnp.float32, -bound1, bound1)
    b1 = jax.random.uniform(k2, (hidden_size,), jnp.float32, -bound1, bound1)
    w2 = jax.random.uniform(k3, (hidden_size, n_actions), jnp.float32, -bound2, bound2)
    b2 = jax.random.uniform(k4, (n_actions,), jnp.float32, -bound2, bound2)
    return w1, b1, w2, b2


def pack_qnet_params(w1, b1, w2, b2):
    """Cast weights to bf16 for the MXU; biases stay f32 as (1, N) rows.
    No zero-padding of K or N (true widths flow straight into the kernel)."""
    w1p = w1.astype(jnp.bfloat16)
    b1p = b1.astype(jnp.float32).reshape(1, -1)
    w2p = w2.astype(jnp.bfloat16)
    b2p = b2.astype(jnp.float32).reshape(1, -1)
    return w1p, b1p, w2p, b2p


def qnet_forward(x, w1p, b1p, w2p, b2p, *, max_tile_b=1024):
    """Fused forward: relu(x @ W1 + b1) @ W2 + b2.

    x:   (B, obs_size) f32 (cast to bf16 inside the kernel)
    w1p: (obs, H) bf16, b1p: (1, H) f32, w2p: (H, n_actions) bf16,
    b2p: (1, n_actions) f32.
    Returns (B, n_actions) f32.
    """
    B, obs = x.shape
    obs_w, hidden = w1p.shape
    assert obs == obs_w, (obs, obs_w)
    _, n_actions = w2p.shape

    # Balanced batch tiling:
    #  * up to max_tile_b rows per grid step (amortize per-step overhead)
    #  * >= 2 steps whenever B >= 16 so v7x's 2 TensorCores both get work
    #  * tile_b = round_up(cdiv(B, n_tiles), 8) so b_pad hugs B.
    n_tiles = _cdiv(B, max_tile_b)
    if B >= 16:
        n_tiles = max(n_tiles, 2)
    tile_b = _round_up(_cdiv(B, n_tiles), 8)
    b_pad = _round_up(B, tile_b)

    # Pad only the batch rows, and only when needed (tiny: true obs width).
    xp = x if b_pad == B else jnp.pad(x, ((0, b_pad - B), (0, 0)))

    grid = (b_pad // tile_b,)
    out = pl.pallas_call(
        qnet_kernel,
        out_shape=jax.ShapeDtypeStruct((b_pad, n_actions), jnp.float32),
        grid=grid,
        in_specs=[
            # x / out tiled along batch; weights & biases resident every step.
            pl.BlockSpec((tile_b, obs), lambda i: (i, 0)),
            pl.BlockSpec((obs, hidden), lambda i: (0, 0)),
            pl.BlockSpec((1, hidden), lambda i: (0, 0)),
            pl.BlockSpec((hidden, n_actions), lambda i: (0, 0)),
            pl.BlockSpec((1, n_actions), lambda i: (0, 0)),
        ],
        out_specs=pl.BlockSpec((tile_b, n_actions), lambda i: (i, 0)),
        compiler_params=pltpu.CompilerParams(
            dimension_semantics=("parallel",),   # shard batch tiles across TCs
        ),
    )(xp, w1p, b1p, w2p, b2p)

    # Slice away batch padding only if any was added. (Padded rows hold
    # relu(b1)@w2 + b2 garbage; harmless because they are dropped here.)
    return out if b_pad == B else out[:B]


def qnet_reference(x, w1, b1, w2, b2):
    """Pure-JAX reference using the same precision path as the kernel
    (bf16 MXU inputs, f32 accumulate, f32 elementwise)."""
    xb = x.astype(jnp.bfloat16)
    h = jnp.dot(xb, w1.astype(jnp.bfloat16), preferred_element_type=jnp.float32)
    h = jnp.maximum(h + b1.reshape(1, -1), 0.0)
    return jnp.dot(h.astype(jnp.bfloat16), w2.astype(jnp.bfloat16),
                   preferred_element_type=jnp.float32) + b2.reshape(1, -1)


# TODO(synk): for a full DQN step, fuse the consumer (argmax for acting,
# gather + TD target for training) into this pallas_call so the kernel writes
# (tile_b, 1) and the Q-value writeback / extra launch disappear entirely.


if __name__ == "__main__":
    # Small shapes implied by the module: grid-world style obs, 4 actions,
    # hidden=128, small replay-minibatch.
    obs_size, n_actions, hidden_size = 12, 4, 128

    key = jax.random.PRNGKey(0)
    kx, kx2, kp = jax.random.split(key, 3)

    w1, b1, w2, b2 = init_qnet_params(kp, obs_size, n_actions, hidden_size)
    w1p, b1p, w2p, b2p = pack_qnet_params(w1, b1, w2, b2)

    # Case 1: tiny batch (single grid step, no padding at all).
    x = jax.random.normal(kx, (8, obs_size), dtype=jnp.float32)
    out = jax.block_until_ready(qnet_forward(x, w1p, b1p, w2p, b2p))
    assert out.shape == (8, n_actions)
    ref = qnet_reference(x, w1, b1, w2, b2)
    assert jnp.allclose(out, ref, atol=1e-2, rtol=1e-2), (
        float(jnp.max(jnp.abs(out - ref))))

    # Case 2: batch that exercises the balanced 2-tile path + row padding.
    x2 = jax.random.normal(kx2, (40, obs_size), dtype=jnp.float32)
    out2 = jax.block_until_ready(qnet_forward(x2, w1p, b1p, w2p, b2p))
    assert out2.shape == (40, n_actions)
    ref2 = qnet_reference(x2, w1, b1, w2, b2)
    assert jnp.allclose(out2, ref2, atol=1e-2, rtol=1e-2), (
        float(jnp.max(jnp.abs(out2 - ref2))))

    print("KERNEL_OK")
</pallas_src>

<mosaic_0001>
module attributes {stable_mosaic.version = 11 : i64} {
  func.func @qnet_kernel(%arg0: i32, %arg1: memref<8x12xf32, #tpu.memory_space<vmem>>, %arg2: memref<12x128xbf16, #tpu.memory_space<vmem>>, %arg3: memref<1x128xf32, #tpu.memory_space<vmem>>, %arg4: memref<128x4xbf16, #tpu.memory_space<vmem>>, %arg5: memref<1x4xf32, #tpu.memory_space<vmem>>, %arg6: memref<8x4xf32, #tpu.memory_space<vmem>>) attributes {dimension_semantics = [#tpu.dimension_semantics<parallel>], iteration_bounds = array<i64: 1>, scalar_prefetch = 0 : i64, scratch_operands = 0 : i64, tpu.core_type = #tpu.core_type<tc>, window_params = [{transform_indices = @transform_0, window_bounds = array<i64: 8, 12>}, {pipeline_mode = #tpu.pipeline_mode<synchronous>, transform_indices = @transform_1, window_bounds = array<i64: 12, 128>}, {pipeline_mode = #tpu.pipeline_mode<synchronous>, transform_indices = @transform_2, window_bounds = array<i64: 1, 128>}, {pipeline_mode = #tpu.pipeline_mode<synchronous>, transform_indices = @transform_3, window_bounds = array<i64: 128, 4>}, {pipeline_mode = #tpu.pipeline_mode<synchronous>, transform_indices = @transform_4, window_bounds = array<i64: 1, 4>}, {transform_indices = @transform_5, window_bounds = array<i64: 8, 4>}]} {
    %c0 = arith.constant 0 : index
    %c0_0 = arith.constant 0 : index
    %0 = vector.load %arg1[%c0, %c0_0] : memref<8x12xf32, #tpu.memory_space<vmem>>, vector<8x12xf32>
    %1 = arith.truncf %0 : vector<8x12xf32> to vector<8x12xbf16>
    %c0_1 = arith.constant 0 : index
    %c0_2 = arith.constant 0 : index
    %2 = vector.load %arg2[%c0_1, %c0_2] : memref<12x128xbf16, #tpu.memory_space<vmem>>, vector<12x128xbf16>
    %cst = arith.constant dense<0.000000e+00> : vector<8x128xf32>
    %3 = tpu.matmul %1, %2, %cst {dimension_numbers = #tpu.dot_dimension_numbers<[1], [0], [0], [1], [0, 0, 1, 1], [], []>} : vector<8x12xbf16>, vector<12x128xbf16>, vector<8x128xf32> -> vector<8x128xf32>
    %c0_3 = arith.constant 0 : index
    %c0_4 = arith.constant 0 : index
    %4 = vector.load %arg3[%c0_3, %c0_4] : memref<1x128xf32, #tpu.memory_space<vmem>>, vector<1x128xf32>
    %5 = vector.broadcast %4 : vector<1x128xf32> to vector<8x128xf32>
    %6 = arith.addf %3, %5 : vector<8x128xf32>
    %cst_5 = arith.constant 0.000000e+00 : f32
    %7 = vector.broadcast %cst_5 : f32 to vector<8x128xf32>
    %8 = arith.maximumf %6, %7 : vector<8x128xf32>
    %9 = arith.truncf %8 : vector<8x128xf32> to vector<8x128xbf16>
    %c0_6 = arith.constant 0 : index
    %c0_7 = arith.constant 0 : index
    %10 = vector.load %arg4[%c0_6, %c0_7] : memref<128x4xbf16, #tpu.memory_space<vmem>>, vector<128x4xbf16>
    %cst_8 = arith.constant dense<0.000000e+00> : vector<8x4xf32>
    %11 = tpu.matmul %9, %10, %cst_8 {dimension_numbers = #tpu.dot_dimension_numbers<[1], [0], [0], [1], [0, 0, 1, 1], [], []>} : vector<8x128xbf16>, vector<128x4xbf16>, vector<8x4xf32> -> vector<8x4xf32>
    %c0_9 = arith.constant 0 : index
    %c0_10 = arith.constant 0 : index
    %12 = vector.load %arg5[%c0_9, %c0_10] : memref<1x4xf32, #tpu.memory_space<vmem>>, vector<1x4xf32>
    %13 = vector.broadcast %12 : vector<1x4xf32> to vector<8x4xf32>
    %14 = arith.addf %11, %13 : vector<8x4xf32>
    %c0_11 = arith.constant 0 : index
    %c0_12 = arith.constant 0 : index
    %15 = vector.load %arg6[%c0_11, %c0_12] : memref<8x4xf32, #tpu.memory_space<vmem>>, vector<8x4xf32>
    tpu.vector_store %arg6[%c0_11, %c0_12], %14 {strides = array<i32>} : memref<8x4xf32, #tpu.memory_space<vmem>>, vector<8x4xf32>,
    return
  }
  func.func @transform_0(%arg0: i32) -> (i32, i32) {
    %c0_i32 = arith.constant 0 : i32
    %c0_i32_0 = arith.constant 0 : i32
    return %arg0, %c0_i32 : i32, i32
  }
  func.func @transform_1(%arg0: i32) -> (i32, i32) {
    %c0_i32 = arith.constant 0 : i32
    %c0_i32_0 = arith.constant 0 : i32
    %c0_i32_1 = arith.constant 0 : i32
    return %c0_i32, %c0_i32_0 : i32, i32
  }
  func.func @transform_2(%arg0: i32) -> (i32, i32) {
    %c0_i32 = arith.constant 0 : i32
    %c0_i32_0 = arith.constant 0 : i32
    %c0_i32_1 = arith.constant 0 : i32
    return %c0_i32, %c0_i32_0 : i32, i32
  }
  func.func @transform_3(%arg0: i32) -> (i32, i32) {
    %c0_i32 = arith.constant 0 : i32
    %c0_i32_0 = arith.constant 0 : i32
    %c0_i32_1 = arith.constant 0 : i32
    return %c0_i32, %c0_i32_0 : i32, i32
  }
  func.func @transform_4(%arg0: i32) -> (i32, i32) {
    %c0_i32 = arith.constant 0 : i32
    %c0_i32_0 = arith.constant 0 : i32
    %c0_i32_1 = arith.constant 0 : i32
    return %c0_i32, %c0_i32_0 : i32, i32
  }
  func.func @transform_5(%arg0: i32) -> (i32, i32) {
    %c0_i32 = arith.constant 0 : i32
    %c0_i32_0 = arith.constant 0 : i32
    return %arg0, %c0_i32 : i32, i32
  }
}

</mosaic_0001>

<llo_original>
// kernel: tpu_custom_call.1
$region0: #{tpu_custom_call.1}
  #allocation0 [shape = 'u32[]', space=smem, size = 0x4, offset = 0x4, fixed_abs, tag = 'smem constant byte address 0x4 - core index']
  #allocation1 [shape = 'u32[72,128]{1,0:T(1,128)}', space=vmem, size = 0x9000, scoped, tag = 'internal scratch']
  %s0 = inlined_call_operand.vmem [shape: f32[8,12], index: 0, kind: input, shape index: {}]
  %s1 = inlined_call_operand.vmem [shape: bf16[12,128], index: 1, kind: input, shape index: {}]
  %s2 = inlined_call_operand.vmem [shape: f32[1,128], index: 2, kind: input, shape index: {}]
  %s3 = inlined_call_operand.vmem [shape: bf16[128,4], index: 3, kind: input, shape index: {}]
  %s4 = inlined_call_operand.vmem [shape: f32[1,4], index: 4, kind: input, shape index: {}]
  %s5 = inlined_call_operand.vmem [shape: f32[8,4], index: 5, kind: output, shape index: {}]
  %s6 = sld [smem:[#allocation0]]
  $region30: #{tpu_custom_call.1} parent=0
    _
  %s8 = ssub.s32 1, %s6
  %s9 = scalar_select 0, %s8, %s6
  // Predicated region
  $region2: #{tpu_custom_call.1} parent=0 // pred_check
    _
  $region3: #{tpu_custom_call.1} parent=0 // pred_check_branch
    %11 = sbr.rel (0) target = $region5
  $region4: #{tpu_custom_call.1} parent=0 // pred_region
    _
  $region5: #{tpu_custom_call.1} parent=0 // pred_fallthru
    _
  // Predicated region
  $region6: #{tpu_custom_call.1} parent=0 // pred_check
    _
  $region7: #{tpu_custom_call.1} parent=0 // pred_check_branch
    %13 = sbr.rel (0) target = $region9
  $region8: #{tpu_custom_call.1} parent=0 // pred_region
    _
  $region9: #{tpu_custom_call.1} parent=0 // pred_fallthru
    _
  // Predicated region
  $region10: #{tpu_custom_call.1} parent=0 // pred_check
    _
  $region11: #{tpu_custom_call.1} parent=0 // pred_check_branch
    %15 = sbr.rel (0) target = $region13
  $region12: #{tpu_custom_call.1} parent=0 // pred_region
    _
  $region13: #{tpu_custom_call.1} parent=0 // pred_fallthru
    _
  // Predicated region
  $region14: #{tpu_custom_call.1} parent=0 // pred_check
    _
  $region15: #{tpu_custom_call.1} parent=0 // pred_check_branch
    %17 = sbr.rel (0) target = $region17
  $region16: #{tpu_custom_call.1} parent=0 // pred_region
    _
  $region17: #{tpu_custom_call.1} parent=0 // pred_fallthru
    _
  // Predicated region
  $region18: #{tpu_custom_call.1} parent=0 // pred_check
    _
  $region19: #{tpu_custom_call.1} parent=0 // pred_check_branch
    %19 = sbr.rel (0) target = $region21
  $region20: #{tpu_custom_call.1} parent=0 // pred_region
    _
  $region21: #{tpu_custom_call.1} parent=0 // pred_fallthru
    _
  %v21 = vld [vmem:[%s0] sm:$0xff]
  %v22 = vpack.c.bf16 %v21, %v21
  %v23 = vld [vmem:[%s1] sm:$0xf]
  %v24 = vld [vmem:[%s1 + $0x4] sm:$0x3]
  %v25 = vld [vmem:[%s2] sm:$0x1]
  %v27 = vperm.slane %v25, 0
  %v31 = vunpack.c.l.b16 %v23
  %v32 = vunpack.c.l.b16 %v24
  %v33 = vpack.c.b16 %v32, %v31
  %vm34 = vcmask 97280
  %v36 = vsel %vm34, %v22, 0
  %vm38 = vcmask 1045504
  %v40 = vsel %vm38, %v33, 0
  %42 = vmatpush.bf16.msra.mxu0 0
  %43 = vmatpush.bf16.msra.mxu0 0
  %44 = vmatpush.bf16.msra.mxu0 0
  %45 = vmatpush.bf16.msra.mxu0 0
  %46 = vmatpush.bf16.msra.mxu0 0
  %47 = vmatpush.bf16.msra.mxu0 0
  %48 = vmatpush.bf16.msra.mxu0 0
  %49 = vmatpush.bf16.msra.mxu0 %v40
  %50 = vmatmul.bf16.gmra.mxu0 %v36
  %v51 = vpop.f32.mrf.mxu0
  %v52 = vadd.f32 %v27, %v51
  %v53 = vpop.f32.mrf.mxu0
  %54 = vdwg.mxu0
  %v55 = vmax.f32 %v52, 0.0
  %v56 = vpack.c.bf16 %v55, %v55
  %v57 = vld [vmem:[%s3] sm:$0xf]
  %v58 = vld [vmem:[%s3 + $0x4] sm:$0xf]
  %v59 = vld [vmem:[%s3 + $0x8] sm:$0xf]
  %v60 = vld [vmem:[%s3 + $0xc] sm:$0xf]
  %v61 = vld [vmem:[%s3 + $0x10] sm:$0xf]
  %v62 = vld [vmem:[%s3 + $0x14] sm:$0xf]
  %v63 = vld [vmem:[%s3 + $0x18] sm:$0xf]
  %v64 = vld [vmem:[%s3 + $0x1c] sm:$0xf]
  %v65 = vld [vmem:[%s3 + $0x20] sm:$0xf]
  %v66 = vld [vmem:[%s3 + $0x24] sm:$0xf]
  %v67 = vld [vmem:[%s3 + $0x28] sm:$0xf]
  %v68 = vld [vmem:[%s3 + $0x2c] sm:$0xf]
  %v69 = vld [vmem:[%s3 + $0x30] sm:$0xf]
  %v70 = vld [vmem:[%s3 + $0x34] sm:$0xf]
  %v71 = vld [vmem:[%s3 + $0x38] sm:$0xf]
  %v72 = vld [vmem:[%s3 + $0x3c] sm:$0xf]
  %v73 = vld [vmem:[%s4] sm:$0x1]
  %v75 = vperm.slane %v73, 0
  %v93 = vunpack.c.l.b16 %v57
  %v94 = vunpack.c.l.b16 %v58
  %v95 = vunpack.c.l.b16 %v59
  %v96 = vunpack.c.l.b16 %v60
  %v97 = vunpack.c.l.b16 %v61
  %v98 = vunpack.c.l.b16 %v62
  %v99 = vunpack.c.l.b16 %v63
  %v100 = vunpack.c.l.b16 %v64
  %v101 = vunpack.c.l.b16 %v65
  %v102 = vunpack.c.l.b16 %v66
  %v103 = vunpack.c.l.b16 %v67
  %v104 = vunpack.c.l.b16 %v68
  %v105 = vunpack.c.l.b16 %v69
  %v106 = vunpack.c.l.b16 %v70
  %v107 = vunpack.c.l.b16 %v71
  %v108 = vunpack.c.l.b16 %v72
  %v109 = vpack.c.b16 %v94, %v93
  %v110 = vpack.c.b16 %v96, %v95
  %v111 = vpack.c.b16 %v98, %v97
  %v112 = vpack.c.b16 %v100, %v99
  %v113 = vpack.c.b16 %v102, %v101
  %v114 = vpack.c.b16 %v104, %v103
  %v115 = vpack.c.b16 %v106, %v105
  %v116 = vpack.c.b16 %v108, %v107
  %125 = vmatpush.bf16.msra.mxu0 %v116
  %126 = vmatpush.bf16.msra.mxu0 %v115
  %127 = vmatpush.bf16.msra.mxu0 %v114
  %128 = vmatpush.bf16.msra.mxu0 %v113
  %129 = vmatpush.bf16.msra.mxu0 %v112
  %130 = vmatpush.bf16.msra.mxu0 %v111
  %131 = vmatpush.bf16.msra.mxu0 %v110
  %132 = vmatpush.bf16.msra.mxu0 %v109
  %133 = vmatmul.bf16.gmra.mxu0 %v56
  %v134 = vpop.f32.mrf.mxu0
  %v135 = vadd.f32 %v75, %v134
  %v136 = vpop.f32.mrf.mxu0
  %137 = vdwg.mxu0
  %vm138 = vcmask 31744
  %139 = vst.msk [vmem:[%s5] sm:$0xff] %vm138, %v135
  // Predicated region
  $region22: #{tpu_custom_call.1} parent=0 // pred_check
    _
  $region23: #{tpu_custom_call.1} parent=0 // pred_check_branch
    %141 = sbr.rel (0) target = $region25
  $region24: #{tpu_custom_call.1} parent=0 // pred_region
    _
  $region25: #{tpu_custom_call.1} parent=0 // pred_fallthru
    _
  // Predicated region
  $region26: #{tpu_custom_call.1} parent=0 // pred_check
    _
  $region27: #{tpu_custom_call.1} parent=0 // pred_check_branch
    %143 = sbr.rel (0) target = $region29
  $region28: #{tpu_custom_call.1} parent=0 // pred_region
    _
  $region29: #{tpu_custom_call.1} parent=0 // pred_fallthru
    _

</llo_original>
